<compile_context>
chip_gen: v7x
topology: tpu7x:2x2x1
jax: 0.10.0
libtpu: 0.0.40
codegen_flags: <defaults>
</compile_context>

<pallas_src>
import jax
import jax.numpy as jnp
import numpy as np
from jax.experimental import pallas as pl
from jax.experimental.pallas import tpu as pltpu


# ---------------------------------------------------------------------------
# Helpers
# ---------------------------------------------------------------------------
def _rup(x, m):
    return (x + m - 1) // m * m


def _vmem_capacity_bytes():
    try:
        return int(pltpu.get_tpu_info().vmem_capacity_bytes)
    except Exception:
        return 64 << 20  # conservative fallback (v7x per-TC VMEM)


def _tile_plan(n_rows, input_dim, z_dim, nf, bow_bytes, tm=None):
    """Generation-aware batch-tile size TM and vmem_limit_bytes."""
    lane = 128
    cap = _vmem_capacity_bytes()
    budget = int(0.45 * cap)  # ~58 MiB on v5e/v6e (128 MiB), ~29 MiB on v7x (64 MiB)

    # Residents (constant index_map) are still double-buffered by Pallas.
    resident = 2 * 4 * (_rup(input_dim, 8) * _rup(nf + 1, lane)   # smt_aug
                        + 8 * _rup(z_dim, lane))                  # w4
    # Streamed / written tiles, double-buffered, lane-padded.
    per_row = 2 * (bow_bytes * _rup(input_dim, lane)              # bow tile (bf16)
                   + 4 * _rup(z_dim, lane)                        # vaez tile
                   + 4 * _rup(nf, lane)                           # features out
                   + 4 * lane)                                    # (TM, 2) logits/probs out

    if tm is None:
        avail = max(budget - resident, per_row * 16)
        tm = max(16, min(2048, (avail // per_row) // 16 * 16))    # x16: bf16 sublane packing
        tm = min(tm, max(16, _rup(n_rows, 16)))

    need = resident + per_row * tm + (4 << 20)                    # + Mosaic scratch headroom
    vmem_limit = int(min(int(0.75 * cap), max(32 << 20, need)))   # <= 48 MiB on v7x
    return tm, vmem_limit


# ---------------------------------------------------------------------------
# Kernel: batch-tiled MLP forward.
#   bow_ref     (TM, input_dim)   bf16, tiled over the grid
#   smt_ref     (input_dim, nf+1) f32, resident (softmax(W1).T | sm_t@wf_feat.T)
#   vaez_ref    (TM, z_dim)       f32, tiled over the grid
#   w4_ref      (1, z_dim)        resident
#   wf_last_ref (1,) SMEM         finallayer weight for the tvaez column
#   b4_ref      (1,) SMEM         lin4 bias
#   bf_ref      (1,) SMEM         finallayer bias
#   feat_ref    (TM, nf)          output
#   lp_ref      (TM, 2)           output: [:,0] = logits, [:,1] = probs
# ---------------------------------------------------------------------------
def mlp_tile_kernel(bow_ref, smt_ref, vaez_ref, w4_ref,
                    wf_last_ref, b4_ref, bf_ref,
                    feat_ref, lp_ref):
    nf = feat_ref.shape[-1]

    # The only MXU matmul: RHS is contraction-major, VMEM-resident, and carries
    # one extra column so it also yields the finallayer feature term.
    out = jnp.dot(bow_ref[...].astype(jnp.float32), smt_ref[...],
                  preferred_element_type=jnp.float32)            # (TM, nf + 1)
    feat_ref[...] = out[:, :nf]

    # Degenerate 1-wide products stay on the VPU (keep the MXU pipeline clean).
    tvaez = (jnp.sum(vaez_ref[...] * w4_ref[...], axis=-1, keepdims=True)
             + b4_ref[0])                                        # (TM, 1)
    logits = out[:, nf:nf + 1] + tvaez * wf_last_ref[0] + bf_ref[0]
    lp_ref[...] = jnp.concatenate([logits, jax.nn.sigmoid(logits)], axis=-1)


# ---------------------------------------------------------------------------
# Wrapper
# ---------------------------------------------------------------------------
def mlp_forward(inputbow, vaez, w1, w4, b4, wf, bf, *, tile_rows=None,
                bow_dtype=jnp.bfloat16):
    vaez = jnp.asarray(vaez, jnp.float32)
    N, input_dim = inputbow.shape
    z_dim = vaez.shape[1]
    num_features = w1.shape[0]

    # Bag-of-words counts are small integers -> exact in bf16; halves the
    # dominant HBM stream.  (Pass bow_dtype=jnp.float32 to disable.)
    inputbow = jnp.asarray(inputbow).astype(bow_dtype)

    # --- one-shot parameter-side preprocessing in plain XLA (layout only) ---
    w1 = jnp.asarray(w1, jnp.float32)
    wf = jnp.asarray(wf, jnp.float32).reshape(1, num_features + 1)
    sm_t = jnp.transpose(jax.nn.softmax(w1, axis=1))               # (input_dim, nf)
    wf_feat = wf[:, :num_features]                                  # (1, nf)
    smt_aug = jnp.concatenate([sm_t, sm_t @ wf_feat.T], axis=1)     # (input_dim, nf+1)
    wf_last = wf[0, num_features:]                                  # (1,)
    w4 = jnp.asarray(w4, jnp.float32).reshape(1, z_dim)
    b4 = jnp.asarray(b4, jnp.float32).reshape(1)
    bf = jnp.asarray(bf, jnp.float32).reshape(1)

    bow_bytes = jnp.dtype(bow_dtype).itemsize
    tm, vmem_limit = _tile_plan(N, input_dim, z_dim, num_features, bow_bytes,
                                tm=tile_rows)
    grid = (pl.cdiv(N, tm),)   # partial trailing block: no pad, no post-slice

    smem = pl.BlockSpec(memory_space=pltpu.MemorySpace.SMEM)

    cost = pl.CostEstimate(
        flops=2 * N * input_dim * (num_features + 1) + 2 * N * (z_dim + 4),
        transcendentals=N,
        bytes_accessed=(bow_bytes * N * input_dim
                        + 4 * N * (z_dim + num_features + 2)
                        + 4 * (input_dim * (num_features + 1) + z_dim + 3)),
    )

    features, lp = pl.pallas_call(
        mlp_tile_kernel,
        grid=grid,
        in_specs=[
            pl.BlockSpec((tm, input_dim), lambda i: (i, 0)),                  # bow tile
            pl.BlockSpec((input_dim, num_features + 1), lambda i: (0, 0)),    # smt_aug (resident)
            pl.BlockSpec((tm, z_dim), lambda i: (i, 0)),                      # vaez tile
            pl.BlockSpec((1, z_dim), lambda i: (0, 0)),                       # w4 (resident)
            smem,                                                             # wf_last scalar
            smem,                                                             # b4 scalar
            smem,                                                             # bf scalar
        ],
        out_specs=(
            pl.BlockSpec((tm, num_features), lambda i: (i, 0)),
            pl.BlockSpec((tm, 2), lambda i: (i, 0)),
        ),
        out_shape=(
            jax.ShapeDtypeStruct((N, num_features), jnp.float32),
            jax.ShapeDtypeStruct((N, 2), jnp.float32),
        ),
        compiler_params=pltpu.CompilerParams(
            dimension_semantics=("parallel",),
            vmem_limit_bytes=vmem_limit,
        ),
        cost_estimate=cost,
    )(inputbow, smt_aug, vaez, w4, wf_last, b4, bf)

    logits = lp[:, 0:1]
    probs = lp[:, 1:2]
    beta_hat = 0.0
    # feature_hats is unused in the module's returned tuple; logit_hats/prob_hats alias logits/probs.
    return features, logits, probs, beta_hat, logits, probs


def xavier_uniform(key, shape):
    fan_out, fan_in = shape
    bound = np.sqrt(6.0 / (fan_in + fan_out))
    return jax.random.uniform(key, shape, jnp.float32, -bound, bound)


if __name__ == "__main__":
    # Small shapes consistent with the module; N chosen not a multiple of the
    # tile to exercise the partial-trailing-block path.
    N, INPUT_DIM, Z_DIM, NUM_FEATURES = 10, 32, 8, 16

    key = jax.random.PRNGKey(0)
    k_bow, k_z, k_w1, k_w4, k_wf, k_bf = jax.random.split(key, 6)

    # Bag-of-words counts: small integers (exactly representable in bf16).
    inputbow = jax.random.randint(k_bow, (N, INPUT_DIM), 0, 6).astype(jnp.float32)
    vaez = jax.random.normal(k_z, (N, Z_DIM), jnp.float32)

    # Deterministic parameter init (matching __init__ shapes)
    w1 = xavier_uniform(k_w1, (NUM_FEATURES, INPUT_DIM))             # lin1.weight
    w4 = xavier_uniform(k_w4, (1, Z_DIM))                            # lin4.weight
    b4 = jnp.zeros((1,), jnp.float32)                                # lin4.bias (zeros_)
    wf = jax.random.uniform(k_wf, (1, NUM_FEATURES + 1), jnp.float32,
                            -0.1, 0.1)                               # finallayer.weight
    bf = jax.random.uniform(k_bf, (1,), jnp.float32, -0.1, 0.1)      # finallayer.bias

    outs = mlp_forward(inputbow, vaez, w1, w4, b4, wf, bf)
    features, logits, probs, beta_hat, logit_hats, prob_hats = outs
    jax.block_until_ready((features, logits, probs))

    # Pure-JAX reference check
    sm_ref = jax.nn.softmax(w1, axis=1)
    feat_ref = inputbow @ sm_ref.T
    tvaez_ref = vaez @ w4.T + b4
    logits_ref = jnp.concatenate([feat_ref, tvaez_ref], axis=1) @ wf.T + bf
    probs_ref = jax.nn.sigmoid(logits_ref)

    assert np.allclose(np.asarray(features), np.asarray(feat_ref), atol=1e-4), "features mismatch"
    assert np.allclose(np.asarray(logits), np.asarray(logits_ref), atol=1e-4), "logits mismatch"
    assert np.allclose(np.asarray(probs), np.asarray(probs_ref), atol=1e-4), "probs mismatch"

    print("KERNEL_OK")
</pallas_src>

<mosaic_0001>
module attributes {stable_mosaic.version = 11 : i64} {
  func.func @mlp_tile_kernel(%arg0: i32, %arg1: memref<16x32xbf16, #tpu.memory_space<vmem>>, %arg2: memref<32x17xf32, #tpu.memory_space<vmem>>, %arg3: memref<16x8xf32, #tpu.memory_space<vmem>>, %arg4: memref<1x8xf32, #tpu.memory_space<vmem>>, %arg5: memref<1xf32, #tpu.memory_space<smem>>, %arg6: memref<1xf32, #tpu.memory_space<smem>>, %arg7: memref<1xf32, #tpu.memory_space<smem>>, %arg8: memref<16x16xf32, #tpu.memory_space<vmem>>, %arg9: memref<16x2xf32, #tpu.memory_space<vmem>>) attributes {dimension_semantics = [#tpu.dimension_semantics<parallel>], iteration_bounds = array<i64: 1>, scalar_prefetch = 0 : i64, scratch_operands = 0 : i64, tpu.core_type = #tpu.core_type<tc>, window_params = [{transform_indices = @transform_0, window_bounds = array<i64: 16, 32>}, {pipeline_mode = #tpu.pipeline_mode<synchronous>, transform_indices = @transform_1, window_bounds = array<i64: 32, 17>}, {transform_indices = @transform_2, window_bounds = array<i64: 16, 8>}, {pipeline_mode = #tpu.pipeline_mode<synchronous>, transform_indices = @transform_3, window_bounds = array<i64: 1, 8>}, {transform_indices = @transform_4, window_bounds = array<i64: 1>}, {transform_indices = @transform_5, window_bounds = array<i64: 1>}, {transform_indices = @transform_6, window_bounds = array<i64: 1>}, {transform_indices = @transform_7, window_bounds = array<i64: 16, 16>}, {transform_indices = @transform_8, window_bounds = array<i64: 16, 2>}]} {
    %c0 = arith.constant 0 : index
    %c0_0 = arith.constant 0 : index
    %0 = vector.load %arg1[%c0, %c0_0] : memref<16x32xbf16, #tpu.memory_space<vmem>>, vector<16x32xbf16>
    %1 = arith.extf %0 : vector<16x32xbf16> to vector<16x32xf32>
    %c0_1 = arith.constant 0 : index
    %c0_2 = arith.constant 0 : index
    %2 = vector.load %arg2[%c0_1, %c0_2] : memref<32x17xf32, #tpu.memory_space<vmem>>, vector<32x17xf32>
    %cst = arith.constant dense<0.000000e+00> : vector<16x17xf32>
    %3 = tpu.matmul %1, %2, %cst {dimension_numbers = #tpu.dot_dimension_numbers<[1], [0], [0], [1], [0, 0, 1, 1], [], []>} : vector<16x32xf32>, vector<32x17xf32>, vector<16x17xf32> -> vector<16x17xf32>
    %4 = vector.extract_strided_slice %3 {offsets = [0, 0], sizes = [16, 16], strides = [1, 1]} : vector<16x17xf32> to vector<16x16xf32>
    %c0_3 = arith.constant 0 : index
    %c0_4 = arith.constant 0 : index
    %5 = vector.load %arg8[%c0_3, %c0_4] : memref<16x16xf32, #tpu.memory_space<vmem>>, vector<16x16xf32>
    tpu.vector_store %arg8[%c0_3, %c0_4], %4 {strides = array<i32>} : memref<16x16xf32, #tpu.memory_space<vmem>>, vector<16x16xf32>,
    %c0_5 = arith.constant 0 : index
    %c0_6 = arith.constant 0 : index
    %6 = vector.load %arg3[%c0_5, %c0_6] : memref<16x8xf32, #tpu.memory_space<vmem>>, vector<16x8xf32>
    %c0_7 = arith.constant 0 : index
    %c0_8 = arith.constant 0 : index
    %7 = vector.load %arg4[%c0_7, %c0_8] : memref<1x8xf32, #tpu.memory_space<vmem>>, vector<1x8xf32>
    %8 = vector.broadcast %7 : vector<1x8xf32> to vector<16x8xf32>
    %9 = arith.mulf %6, %8 : vector<16x8xf32>
    %cst_9 = arith.constant dense<0.000000e+00> : vector<16xf32>
    %10 = vector.multi_reduction <add>, %9, %cst_9 [1] : vector<16x8xf32> to vector<16xf32>
    %11 = vector.shape_cast %10 : vector<16xf32> to vector<16x1xf32>
    %c0_10 = arith.constant 0 : index
    %12 = memref.load %arg6[%c0_10] : memref<1xf32, #tpu.memory_space<smem>>
    %13 = vector.broadcast %12 : f32 to vector<16x1xf32>
    %14 = arith.addf %11, %13 : vector<16x1xf32>
    %15 = vector.extract_strided_slice %3 {offsets = [0, 16], sizes = [16, 1], strides = [1, 1]} : vector<16x17xf32> to vector<16x1xf32>
    %c0_11 = arith.constant 0 : index
    %16 = memref.load %arg5[%c0_11] : memref<1xf32, #tpu.memory_space<smem>>
    %17 = vector.broadcast %16 : f32 to vector<16x1xf32>
    %18 = arith.mulf %14, %17 : vector<16x1xf32>
    %19 = arith.addf %15, %18 : vector<16x1xf32>
    %c0_12 = arith.constant 0 : index
    %20 = memref.load %arg7[%c0_12] : memref<1xf32, #tpu.memory_space<smem>>
    %21 = vector.broadcast %20 : f32 to vector<16x1xf32>
    %22 = arith.addf %19, %21 : vector<16x1xf32>
    %23 = arith.negf %22 : vector<16x1xf32>
    %24 = math.exp %23 : vector<16x1xf32>
    %cst_13 = arith.constant 1.000000e+00 : f32
    %25 = vector.broadcast %cst_13 : f32 to vector<16x1xf32>
    %26 = arith.addf %25, %24 : vector<16x1xf32>
    %27 = arith.divf %25, %26 : vector<16x1xf32>
    %28 = tpu.concatenate %22, %27 in 1 : vector<16x1xf32>, vector<16x1xf32> -> vector<16x2xf32>
    %c0_14 = arith.constant 0 : index
    %c0_15 = arith.constant 0 : index
    %29 = vector.load %arg9[%c0_14, %c0_15] : memref<16x2xf32, #tpu.memory_space<vmem>>, vector<16x2xf32>
    tpu.vector_store %arg9[%c0_14, %c0_15], %28 {strides = array<i32>} : memref<16x2xf32, #tpu.memory_space<vmem>>, vector<16x2xf32>,
    return
  }
  func.func @transform_0(%arg0: i32) -> (i32, i32) {
    %c0_i32 = arith.constant 0 : i32
    %c0_i32_0 = arith.constant 0 : i32
    return %arg0, %c0_i32 : i32, i32
  }
  func.func @transform_1(%arg0: i32) -> (i32, i32) {
    %c0_i32 = arith.constant 0 : i32
    %c0_i32_0 = arith.constant 0 : i32
    %c0_i32_1 = arith.constant 0 : i32
    return %c0_i32, %c0_i32_0 : i32, i32
  }
  func.func @transform_2(%arg0: i32) -> (i32, i32) {
    %c0_i32 = arith.constant 0 : i32
    %c0_i32_0 = arith.constant 0 : i32
    return %arg0, %c0_i32 : i32, i32
  }
  func.func @transform_3(%arg0: i32) -> (i32, i32) {
    %c0_i32 = arith.constant 0 : i32
    %c0_i32_0 = arith.constant 0 : i32
    %c0_i32_1 = arith.constant 0 : i32
    return %c0_i32, %c0_i32_0 : i32, i32
  }
  func.func @transform_4(%arg0: i32) -> i32 {
    %c0_i32 = arith.constant 0 : i32
    %c0_i32_0 = arith.constant 0 : i32
    return %c0_i32 : i32
  }
  func.func @transform_5(%arg0: i32) -> i32 {
    %c0_i32 = arith.constant 0 : i32
    %c0_i32_0 = arith.constant 0 : i32
    return %c0_i32 : i32
  }
  func.func @transform_6(%arg0: i32) -> i32 {
    %c0_i32 = arith.constant 0 : i32
    %c0_i32_0 = arith.constant 0 : i32
    return %c0_i32 : i32
  }
  func.func @transform_7(%arg0: i32) -> (i32, i32) {
    %c0_i32 = arith.constant 0 : i32
    %c0_i32_0 = arith.constant 0 : i32
    return %arg0, %c0_i32 : i32, i32
  }
  func.func @transform_8(%arg0: i32) -> (i32, i32) {
    %c0_i32 = arith.constant 0 : i32
    %c0_i32_0 = arith.constant 0 : i32
    return %arg0, %c0_i32 : i32, i32
  }
}

</mosaic_0001>

<llo_original>
// kernel: tpu_custom_call.1
$region0: #{tpu_custom_call.1}
  #allocation0 [shape = 'u32[]', space=smem, size = 0x4, offset = 0x4, fixed_abs, tag = 'smem constant byte address 0x4 - core index']
  #allocation1 [shape = 'u32[144,128]{1,0:T(1,128)}', space=vmem, size = 0x12000, scoped, tag = 'internal scratch']
  #allocation2 [shape = 'f32[1]{0:T(128)S(6)}', space=smem, size = 0x200, scoped, tag = 'scoped memory for tpu_custom_call.1']
  #allocation3 [shape = 'f32[1]{0:T(128)S(6)}', space=smem, size = 0x200, scoped, tag = 'scoped memory for tpu_custom_call.1']
  #allocation4 [shape = 'f32[1]{0:T(128)S(6)}', space=smem, size = 0x200, scoped, tag = 'scoped memory for tpu_custom_call.1']
  %s0 = inlined_call_operand.vmem [shape: bf16[10,32], index: 0, kind: input, shape index: {}]
  %s1 = inlined_call_operand.vmem [shape: f32[32,17], index: 1, kind: input, shape index: {}]
  %s2 = inlined_call_operand.vmem [shape: f32[10,8], index: 2, kind: input, shape index: {}]
  %s3 = inlined_call_operand.vmem [shape: f32[1,8], index: 3, kind: input, shape index: {}]
  %s4 = inlined_call_operand.<no memory space> [shape: f32[1], index: 4, kind: input, shape index: {}]
  %s5 = inlined_call_operand.<no memory space> [shape: f32[1], index: 5, kind: input, shape index: {}]
  %s6 = inlined_call_operand.<no memory space> [shape: f32[1], index: 6, kind: input, shape index: {}]
  %s7 = inlined_call_operand.hbm [shape: f32[10,16], index: 7, kind: output, shape index: {0}]
  %s8 = inlined_call_operand.vmem [shape: f32[10,2], index: 8, kind: output, shape index: {1}]
  %9 = xla_tuple %s7, %s8
  %s10 = sld [smem:[#allocation0]]
  $region46: #{tpu_custom_call.1} parent=0
    _
  %s12 = ssub.s32 1, %s10
  %s13 = scalar_select 0, %s12, %s10
  %14 = sst [smem:[#allocation2]] %s4
  %15 = sst [smem:[#allocation3]] %s5
  %16 = sst [smem:[#allocation4]] %s6
  $region1: #{tpu_custom_call.1} parent=0
    #allocation5 [shape = 'u8[8192]{0}', space=vmem, size = 0x2000, scoped, tag = 'output window, operand 0, single buffered']
    #allocation6 [shape = 's32[1]{0}', space=sflag, size = 0x4, scoped, tag = 'scoped memory for tpu_custom_call.1']
    %17 = vsyncpa [#allocation6], 0
    // Predicated region
    $region2: #{tpu_custom_call.1} parent=1 // pred_check
      _
    $region3: #{tpu_custom_call.1} parent=1 // pred_check_branch
      %19 = sbr.rel (0) target = $region5
    $region4: #{tpu_custom_call.1} parent=1 // pred_region
      _
    $region5: #{tpu_custom_call.1} parent=1 // pred_fallthru
      _
    // Predicated region
    $region6: #{tpu_custom_call.1} parent=1 // pred_check
      _
    $region7: #{tpu_custom_call.1} parent=1 // pred_check_branch
      %21 = sbr.rel (0) target = $region9
    $region8: #{tpu_custom_call.1} parent=1 // pred_region
      _
    $region9: #{tpu_custom_call.1} parent=1 // pred_fallthru
      _
    // Predicated region
    $region10: #{tpu_custom_call.1} parent=1 // pred_check
      _
    $region11: #{tpu_custom_call.1} parent=1 // pred_check_branch
      %23 = sbr.rel (0) target = $region13
    $region12: #{tpu_custom_call.1} parent=1 // pred_region
      _
    $region13: #{tpu_custom_call.1} parent=1 // pred_fallthru
      _
    // Predicated region
    $region14: #{tpu_custom_call.1} parent=1 // pred_check
      _
    $region15: #{tpu_custom_call.1} parent=1 // pred_check_branch
      %25 = sbr.rel (0) target = $region17
    $region16: #{tpu_custom_call.1} parent=1 // pred_region
      _
    $region17: #{tpu_custom_call.1} parent=1 // pred_fallthru
      _
    // Predicated region
    $region18: #{tpu_custom_call.1} parent=1 // pred_check
      _
    $region19: #{tpu_custom_call.1} parent=1 // pred_check_branch
      %27 = sbr.rel (0) target = $region21
    $region20: #{tpu_custom_call.1} parent=1 // pred_region
      _
    $region21: #{tpu_custom_call.1} parent=1 // pred_fallthru
      _
    // Predicated region
    $region22: #{tpu_custom_call.1} parent=1 // pred_check
      _
    $region23: #{tpu_custom_call.1} parent=1 // pred_check_branch
      %29 = sbr.rel (0) target = $region25
    $region24: #{tpu_custom_call.1} parent=1 // pred_region
      _
    $region25: #{tpu_custom_call.1} parent=1 // pred_fallthru
      _
    // Predicated region
    $region26: #{tpu_custom_call.1} parent=1 // pred_check
      _
    $region27: #{tpu_custom_call.1} parent=1 // pred_check_branch
      %31 = sbr.rel (0) target = $region29
    $region28: #{tpu_custom_call.1} parent=1 // pred_region
      _
    $region29: #{tpu_custom_call.1} parent=1 // pred_fallthru
      _
    %v32 = vld [vmem:[%s0] sm:$0xf]
    %v33 = vld [vmem:[%s0 + $0x4] sm:$0xf]
    %v34 = vunpack.c.l.bf16 %v32
    %v35 = vunpack.c.l.bf16 %v33
    %v36 = vld [vmem:[%s1] sm:$0xff]
    %v37 = vld [vmem:[%s1 + $0x8] sm:$0xff]
    %v38 = vld [vmem:[%s1 + $0x10] sm:$0xff]
    %v39 = vld [vmem:[%s1 + $0x18] sm:$0xff]
    %vm40 = vcmask 261120
    %v42 = vsel %vm40, %v34, 0
    %v45 = vsel %vm40, %v35, 0
    %47 = vmatprep.subr.mxu0 0.0
    %48 = vmatpush1.msra.mxu0 %v36
    %49 = vmatprep.subr.mxu0 0.0
    %50 = vmatpush1.msra.mxu0 %v37
    %51 = vmatprep.subr.mxu0 0.0
    %52 = vmatpush1.msra.mxu0 %v38
    %53 = vmatprep.subr.mxu0 0.0
    %54 = vmatpush1.msra.mxu0 %v39
    %55 = vmatprep.subr.mxu0 0.0
    %56 = vmatpush1.msra.mxu0 0.0
    %57 = vmatprep.subr.mxu0 0.0
    %58 = vmatpush1.msra.mxu0 0.0
    %59 = vmatprep.subr.mxu0 0.0
    %60 = vmatpush1.msra.mxu0 0.0
    %61 = vmatprep.subr.mxu0 0.0
    %62 = vmatpush1.msra.mxu0 0.0
    %63 = vmatprep.subr.mxu0 0.0
    %64 = vmatpush1.msra.mxu0 0.0
    %65 = vmatprep.subr.mxu0 0.0
    %66 = vmatpush1.msra.mxu0 0.0
    %67 = vmatprep.subr.mxu0 0.0
    %68 = vmatpush1.msra.mxu0 0.0
    %69 = vmatprep.subr.mxu0 0.0
    %70 = vmatpush1.msra.mxu0 0.0
    %71 = vmatprep.subr.mxu0 0.0
    %72 = vmatpush1.msra.mxu0 0.0
    %73 = vmatprep.subr.mxu0 0.0
    %74 = vmatpush1.msra.mxu0 0.0
    %75 = vmatprep.subr.mxu0 0.0
    %76 = vmatpush1.msra.mxu0 0.0
    %77 = vmatprep.subr.mxu0 0.0
    %78 = vmatpush1.msra.mxu0 0.0
    %79 = vmatprep.subr.mxu0 0.0
    %80 = vmatpush1.msra.mxu0 0.0
    %81 = vmatprep.subr.mxu0 0.0
    %82 = vmatpush1.msra.mxu0 0.0
    %83 = vmatprep.subr.mxu0 0.0
    %84 = vmatpush1.msra.mxu0 0.0
    %85 = vmatprep.subr.mxu0 0.0
    %86 = vmatpush1.msra.mxu0 0.0
    %87 = vmatprep.subr.mxu0 0.0
    %88 = vmatpush1.msra.mxu0 0.0
    %89 = vmatprep.subr.mxu0 0.0
    %90 = vmatpush1.msra.mxu0 0.0
    %91 = vmatprep.subr.mxu0 0.0
    %92 = vmatpush1.msra.mxu0 0.0
    %93 = vmatprep.subr.mxu0 0.0
    %94 = vmatpush1.msra.mxu0 0.0
    %95 = vmatprep.subr.mxu0 0.0
    %96 = vmatpush1.msra.mxu0 0.0
    %97 = vmatprep.subr.mxu0 0.0
    %98 = vmatpush1.msra.mxu0 0.0
    %99 = vmatprep.subr.mxu0 0.0
    %100 = vmatpush1.msra.mxu0 0.0
    %101 = vmatprep.subr.mxu0 0.0
    %102 = vmatpush1.msra.mxu0 0.0
    %103 = vmatprep.subr.mxu0 0.0
    %104 = vmatpush1.msra.mxu0 0.0
    %105 = vmatprep.subr.mxu0 0.0
    %106 = vmatpush1.msra.mxu0 0.0
    %107 = vmatprep.subr.mxu0 0.0
    %108 = vmatpush1.msra.mxu0 0.0
    %109 = vmatprep.subr.mxu0 0.0
    %110 = vmatpush1.msra.mxu0 0.0
    %111 = vmatprep.mubr.f32.mxu0 0.0
    %112 = vmatmul.mubr.f32.gmra.mrb[0].mxu0 %v42
    %v113 = vpop.f32.mrb[0].mxu0
    %v114 = vadd.f32 0.0, %v113
    %v115 = vpop.f32.mrb[0].mxu0
    %116 = vmatprep.mubr.f32.mxu0 0.0
    %117 = vmatmul.mubr.f32.gmra.mrb[0].mxu0 %v45
    %v118 = vpop.f32.mrb[0].mxu0
    %v119 = vadd.f32 0.0, %v118
    %v120 = vpop.f32.mrb[0].mxu0
    %121 = vdwg.mxu0
    %vm122 = vcmask 130048
    %123 = vst.msk [vmem:[#allocation5] sm:$0xff] %vm122, %v114
    %124 = vst.msk [vmem:[#allocation5 + $0x8] sm:$0xff] %vm122, %v119
    %v125 = vld [vmem:[%s2] sm:$0xff]
    %v126 = vld [vmem:[%s2 + $0x8] sm:$0xff]
    %v127 = vld [vmem:[%s3] sm:$0x1]
    %v129 = vlaneseq
    %v130 = vshrl.u32 %v129, 7
    %v131 = vsub.s32 0, %v130
    %v132 = vrot.slane %v127, %v131
    %v134 = vmul.f32 %v125, %v132
    %v135 = vmul.f32 %v126, %v132
    %vm136 = vcmask 64512
    %v137 = vsel %vm136, %v134, 0.0
    %138 = vadd.xlane.f32.xlu0 %v137
    %v139 = vpop.xlane.xlu0 %138
    %v140 = vsel %vm136, %v135, 0.0
    %141 = vadd.xlane.f32.xlu0 %v140
    %v142 = vpop.xlane.xlu0 %141
    %s143 = sld [smem:[#allocation3]]
    %v144 = vstv %s143
    %v145 = vadd.f32 %v139, %v144
    %v146 = vadd.f32 %v142, %v144
    %s147 = sld [smem:[#allocation2]]
    %v148 = vstv %s147
    %v149 = vmul.f32 %v145, %v148
    %v150 = vmul.f32 %v146, %v148
    %v151 = vadd.f32 %v114, %v149
    %v152 = vadd.f32 %v119, %v150
    %s153 = sld [smem:[#allocation4]]
    %v154 = vstv %s153
    %v155 = vadd.f32 %v151, %v154
    %v156 = vadd.f32 %v152, %v154
    %v157 = vxor.u32 %v155, 2147483648
    %v158 = vxor.u32 %v156, 2147483648
    %v159 = vmul.f32 %v157, 1.442695
    %v160 = vpow.pop %v159
    %v161 = vmul.f32 %v158, 1.442695
    %v162 = vpow.pop %v161
    %v163 = vadd.f32 %v160, 1.0
    %v164 = vadd.f32 %v162, 1.0
    %v165 = vrcp.pop %v163
    %v166 = vmul.f32 1.0, %v165
    %v167 = vrcp.pop %v164
    %v168 = vmul.f32 1.0, %v167
    %171 = vrot.lane.b32.xlu0 %v155, 112
    %v172 = vpop.permute.xlu0 %171
    %173 = vrot.lane.b32.xlu0 %v156, 112
    %v174 = vpop.permute.xlu0 %173
    %179 = vrot.lane.b32.xlu0 %v166, 113
    %v180 = vpop.permute.xlu0 %179
    %181 = vrot.lane.b32.xlu0 %v168, 113
    %v182 = vpop.permute.xlu0 %181
    %vm185 = vcmask 7168
    %v186 = vsel %vm185, %v172, %v180
    %v187 = vsel %vm185, %v174, %v182
    %vm188 = vcmask 15360
    %189 = vst.msk [vmem:[%s8] sm:$0xff] %vm188, %v186
    %190 = vst.msk [vmem:[%s8 + $0x8] sm:$0xff] %vm188, %v187
    // Predicated region
    $region30: #{tpu_custom_call.1} parent=1 // pred_check
      _
    $region31: #{tpu_custom_call.1} parent=1 // pred_check_branch
      %192 = sbr.rel (0) target = $region33
    $region32: #{tpu_custom_call.1} parent=1 // pred_region
      %s194 = ssub.s32 256, 256
      %195 = vsyncadd [#allocation6], %s194
      %s196 = sshll.u32 [#allocation5], 4
      %s197 = int_to_ptr.vmem [resolvable:$true] %s196
      %202 = dma.vmem_to_hbm [thread:$0]  %s197, 256, %s7, [#allocation6], 128, 128, 8
    $region33: #{tpu_custom_call.1} parent=1 // pred_fallthru
      _
    // Predicated region
    $region34: #{tpu_custom_call.1} parent=1 // pred_check
      _
    $region35: #{tpu_custom_call.1} parent=1 // pred_check_branch
      %204 = sbr.rel (0) target = $region37
    $region36: #{tpu_custom_call.1} parent=1 // pred_region
      _
    $region37: #{tpu_custom_call.1} parent=1 // pred_fallthru
      _
    // Predicated region
    $region38: #{tpu_custom_call.1} parent=1 // pred_check
      _
    $region39: #{tpu_custom_call.1} parent=1 // pred_check_branch
      %206 = sbr.rel (0) target = $region41
    $region40: #{tpu_custom_call.1} parent=1 // pred_region
      %207 = dma.done [#allocation6], 256
    $region41: #{tpu_custom_call.1} parent=1 // pred_fallthru
      _
    // Predicated region
    $region42: #{tpu_custom_call.1} parent=1 // pred_check
      _
    $region43: #{tpu_custom_call.1} parent=1 // pred_check_branch
      %209 = sbr.rel (0) target = $region45
    $region44: #{tpu_custom_call.1} parent=1 // pred_region
      _
    $region45: #{tpu_custom_call.1} parent=1 // pred_fallthru
      _
    %210 = vsyncpa [#allocation6], 1

</llo_original>
